<compile_context>
chip_gen: v7x
topology: tpu7x:2x2x1
jax: 0.10.0
libtpu: 0.0.40
codegen_flags: <defaults>
</compile_context>

<pallas_src>
import jax
import jax.numpy as jnp
from jax.experimental import pallas as pl
from jax.experimental.pallas import tpu as pltpu

N = 1000          # matches torch.linspace(-1, 1, 1000).unsqueeze(1)
IN_F = 1
HID_F = 10
OUT_F = 1
LANES = 128
SUBLANES = 8
VREG_ELEMS = SUBLANES * LANES   # 1024
N_PARAMS = HID_F + HID_F + HID_F * OUT_F + OUT_F   # 31


def mlp_kernel(x_ref, p_ref, o_ref):
    # x_ref: (rows, 128) f32 in VMEM (lane-dense, whole array = one block)
    # p_ref: (31,) f32 in SMEM; layout w1[0:10], b1[10:20], w2[20:30], b2[30]
    # o_ref: (rows, 128) f32 in VMEM
    x = x_ref[...]                                    # full vreg(s)
    acc = jnp.full_like(x, p_ref[3 * HID_F])          # start from output bias b2
    # Unrolled hidden loop: 10 scalar FMAs + ReLU, all on the VPU.
    # Deliberately NOT a fori_loop (per-iter overhead rivals the body) and
    # NOT a jnp.dot (a (1024,1)x(1,10) matmul wastes the MXU + push/pop).
    for j in range(HID_F):
        h = jnp.maximum(x * p_ref[j] + p_ref[HID_F + j], 0.0)
        acc = acc + p_ref[2 * HID_F + j] * h
    o_ref[...] = acc                                  # single unmasked store


@jax.jit
def net_forward(x, w1, b1, w2, b2):
    # x: (n, 1) float32
    # w1: (IN_F, HID_F), b1: (HID_F,), w2: (HID_F, OUT_F), b2: (OUT_F,)
    n = x.shape[0]
    n_pad = ((n + VREG_ELEMS - 1) // VREG_ELEMS) * VREG_ELEMS
    rows = n_pad // LANES

    # Lane-dense packing: (n,1) -> pad -> (rows, 128). Padded lanes are zeros;
    # they compute harmless garbage and are sliced off afterwards. Under jit
    # these reshapes fuse into the pallas_call operand / consumer.
    x2d = jnp.pad(x.reshape(-1), (0, n_pad - n)).reshape(rows, LANES)

    # One flat SMEM parameter operand (order-correct because IN_F==OUT_F==1;
    # a general Linear would need an explicit transpose of PyTorch's
    # (out_features, in_features) layout before flattening).
    params = jnp.concatenate(
        [w1.reshape(HID_F), b1.reshape(HID_F),
         w2.reshape(HID_F), b2.reshape(OUT_F)]
    ).astype(jnp.float32)

    out2d = pl.pallas_call(
        mlp_kernel,
        out_shape=jax.ShapeDtypeStruct((rows, LANES), jnp.float32),
        in_specs=[
            pl.BlockSpec(memory_space=pltpu.MemorySpace.VMEM),   # x (full block)
            pl.BlockSpec(memory_space=pltpu.MemorySpace.SMEM),   # packed params
        ],
        out_specs=pl.BlockSpec(memory_space=pltpu.MemorySpace.VMEM),
        cost_estimate=pl.CostEstimate(
            flops=4 * n_pad * HID_F,                 # ~40K FMAs+adds
            transcendentals=0,
            bytes_accessed=2 * n_pad * 4 + N_PARAMS * 4,   # ~8 KB
        ),
    )(x2d, params)

    return out2d.reshape(n_pad, 1)[:n]


def init_params(key):
    # Deterministic init mimicking PyTorch's default Linear init:
    # U(-1/sqrt(fan_in), 1/sqrt(fan_in)) for both weight and bias.
    k1, k2, k3, k4 = jax.random.split(key, 4)
    bound1 = 1.0 / jnp.sqrt(jnp.float32(IN_F))
    bound2 = 1.0 / jnp.sqrt(jnp.float32(HID_F))
    w1 = jax.random.uniform(k1, (IN_F, HID_F), jnp.float32, -bound1, bound1)
    b1 = jax.random.uniform(k2, (HID_F,), jnp.float32, -bound1, bound1)
    w2 = jax.random.uniform(k3, (HID_F, OUT_F), jnp.float32, -bound2, bound2)
    b2 = jax.random.uniform(k4, (OUT_F,), jnp.float32, -bound2, bound2)
    return w1, b1, w2, b2


if __name__ == "__main__":
    key = jax.random.PRNGKey(0)
    # Same input the original script builds: linspace(-1, 1, 1000).unsqueeze(1)
    x = jnp.linspace(-1.0, 1.0, N, dtype=jnp.float32).reshape(N, IN_F)

    w1, b1, w2, b2 = init_params(key)

    out = net_forward(x, w1, b1, w2, b2)
    out = jax.block_until_ready(out)

    # Pure-JAX reference (same math as the PyTorch forward).
    ref = jnp.maximum(x @ w1 + b1, 0.0) @ w2 + b2
    assert out.shape == (N, OUT_F)
    assert jnp.allclose(out, ref, atol=1e-5, rtol=1e-5)

    print("KERNEL_OK")
</pallas_src>

<mosaic_0001>
module attributes {stable_mosaic.version = 11 : i64} {
  func.func @mlp_kernel(%arg0: memref<8x128xf32, #tpu.memory_space<vmem>>, %arg1: memref<31xf32, #tpu.memory_space<smem>>, %arg2: memref<8x128xf32, #tpu.memory_space<vmem>>) attributes {dimension_semantics = [], scalar_prefetch = 0 : i64, scratch_operands = 0 : i64, tpu.core_type = #tpu.core_type<tc>} {
    %c0 = arith.constant 0 : index
    %c0_0 = arith.constant 0 : index
    %0 = vector.load %arg0[%c0, %c0_0] : memref<8x128xf32, #tpu.memory_space<vmem>>, vector<8x128xf32>
    %c30 = arith.constant 30 : index
    %1 = memref.load %arg1[%c30] : memref<31xf32, #tpu.memory_space<smem>>
    %2 = vector.broadcast %1 : f32 to vector<8x128xf32>
    %c0_1 = arith.constant 0 : index
    %3 = memref.load %arg1[%c0_1] : memref<31xf32, #tpu.memory_space<smem>>
    %4 = vector.broadcast %3 : f32 to vector<8x128xf32>
    %5 = arith.mulf %0, %4 : vector<8x128xf32>
    %c10 = arith.constant 10 : index
    %6 = memref.load %arg1[%c10] : memref<31xf32, #tpu.memory_space<smem>>
    %7 = vector.broadcast %6 : f32 to vector<8x128xf32>
    %8 = arith.addf %5, %7 : vector<8x128xf32>
    %cst = arith.constant 0.000000e+00 : f32
    %9 = vector.broadcast %cst : f32 to vector<8x128xf32>
    %10 = arith.maximumf %8, %9 : vector<8x128xf32>
    %c20 = arith.constant 20 : index
    %11 = memref.load %arg1[%c20] : memref<31xf32, #tpu.memory_space<smem>>
    %12 = vector.broadcast %11 : f32 to vector<8x128xf32>
    %13 = arith.mulf %12, %10 : vector<8x128xf32>
    %14 = arith.addf %2, %13 : vector<8x128xf32>
    %c1 = arith.constant 1 : index
    %15 = memref.load %arg1[%c1] : memref<31xf32, #tpu.memory_space<smem>>
    %16 = vector.broadcast %15 : f32 to vector<8x128xf32>
    %17 = arith.mulf %0, %16 : vector<8x128xf32>
    %c11 = arith.constant 11 : index
    %18 = memref.load %arg1[%c11] : memref<31xf32, #tpu.memory_space<smem>>
    %19 = vector.broadcast %18 : f32 to vector<8x128xf32>
    %20 = arith.addf %17, %19 : vector<8x128xf32>
    %cst_2 = arith.constant 0.000000e+00 : f32
    %21 = vector.broadcast %cst_2 : f32 to vector<8x128xf32>
    %22 = arith.maximumf %20, %21 : vector<8x128xf32>
    %c21 = arith.constant 21 : index
    %23 = memref.load %arg1[%c21] : memref<31xf32, #tpu.memory_space<smem>>
    %24 = vector.broadcast %23 : f32 to vector<8x128xf32>
    %25 = arith.mulf %24, %22 : vector<8x128xf32>
    %26 = arith.addf %14, %25 : vector<8x128xf32>
    %c2 = arith.constant 2 : index
    %27 = memref.load %arg1[%c2] : memref<31xf32, #tpu.memory_space<smem>>
    %28 = vector.broadcast %27 : f32 to vector<8x128xf32>
    %29 = arith.mulf %0, %28 : vector<8x128xf32>
    %c12 = arith.constant 12 : index
    %30 = memref.load %arg1[%c12] : memref<31xf32, #tpu.memory_space<smem>>
    %31 = vector.broadcast %30 : f32 to vector<8x128xf32>
    %32 = arith.addf %29, %31 : vector<8x128xf32>
    %cst_3 = arith.constant 0.000000e+00 : f32
    %33 = vector.broadcast %cst_3 : f32 to vector<8x128xf32>
    %34 = arith.maximumf %32, %33 : vector<8x128xf32>
    %c22 = arith.constant 22 : index
    %35 = memref.load %arg1[%c22] : memref<31xf32, #tpu.memory_space<smem>>
    %36 = vector.broadcast %35 : f32 to vector<8x128xf32>
    %37 = arith.mulf %36, %34 : vector<8x128xf32>
    %38 = arith.addf %26, %37 : vector<8x128xf32>
    %c3 = arith.constant 3 : index
    %39 = memref.load %arg1[%c3] : memref<31xf32, #tpu.memory_space<smem>>
    %40 = vector.broadcast %39 : f32 to vector<8x128xf32>
    %41 = arith.mulf %0, %40 : vector<8x128xf32>
    %c13 = arith.constant 13 : index
    %42 = memref.load %arg1[%c13] : memref<31xf32, #tpu.memory_space<smem>>
    %43 = vector.broadcast %42 : f32 to vector<8x128xf32>
    %44 = arith.addf %41, %43 : vector<8x128xf32>
    %cst_4 = arith.constant 0.000000e+00 : f32
    %45 = vector.broadcast %cst_4 : f32 to vector<8x128xf32>
    %46 = arith.maximumf %44, %45 : vector<8x128xf32>
    %c23 = arith.constant 23 : index
    %47 = memref.load %arg1[%c23] : memref<31xf32, #tpu.memory_space<smem>>
    %48 = vector.broadcast %47 : f32 to vector<8x128xf32>
    %49 = arith.mulf %48, %46 : vector<8x128xf32>
    %50 = arith.addf %38, %49 : vector<8x128xf32>
    %c4 = arith.constant 4 : index
    %51 = memref.load %arg1[%c4] : memref<31xf32, #tpu.memory_space<smem>>
    %52 = vector.broadcast %51 : f32 to vector<8x128xf32>
    %53 = arith.mulf %0, %52 : vector<8x128xf32>
    %c14 = arith.constant 14 : index
    %54 = memref.load %arg1[%c14] : memref<31xf32, #tpu.memory_space<smem>>
    %55 = vector.broadcast %54 : f32 to vector<8x128xf32>
    %56 = arith.addf %53, %55 : vector<8x128xf32>
    %cst_5 = arith.constant 0.000000e+00 : f32
    %57 = vector.broadcast %cst_5 : f32 to vector<8x128xf32>
    %58 = arith.maximumf %56, %57 : vector<8x128xf32>
    %c24 = arith.constant 24 : index
    %59 = memref.load %arg1[%c24] : memref<31xf32, #tpu.memory_space<smem>>
    %60 = vector.broadcast %59 : f32 to vector<8x128xf32>
    %61 = arith.mulf %60, %58 : vector<8x128xf32>
    %62 = arith.addf %50, %61 : vector<8x128xf32>
    %c5 = arith.constant 5 : index
    %63 = memref.load %arg1[%c5] : memref<31xf32, #tpu.memory_space<smem>>
    %64 = vector.broadcast %63 : f32 to vector<8x128xf32>
    %65 = arith.mulf %0, %64 : vector<8x128xf32>
    %c15 = arith.constant 15 : index
    %66 = memref.load %arg1[%c15] : memref<31xf32, #tpu.memory_space<smem>>
    %67 = vector.broadcast %66 : f32 to vector<8x128xf32>
    %68 = arith.addf %65, %67 : vector<8x128xf32>
    %cst_6 = arith.constant 0.000000e+00 : f32
    %69 = vector.broadcast %cst_6 : f32 to vector<8x128xf32>
    %70 = arith.maximumf %68, %69 : vector<8x128xf32>
    %c25 = arith.constant 25 : index
    %71 = memref.load %arg1[%c25] : memref<31xf32, #tpu.memory_space<smem>>
    %72 = vector.broadcast %71 : f32 to vector<8x128xf32>
    %73 = arith.mulf %72, %70 : vector<8x128xf32>
    %74 = arith.addf %62, %73 : vector<8x128xf32>
    %c6 = arith.constant 6 : index
    %75 = memref.load %arg1[%c6] : memref<31xf32, #tpu.memory_space<smem>>
    %76 = vector.broadcast %75 : f32 to vector<8x128xf32>
    %77 = arith.mulf %0, %76 : vector<8x128xf32>
    %c16 = arith.constant 16 : index
    %78 = memref.load %arg1[%c16] : memref<31xf32, #tpu.memory_space<smem>>
    %79 = vector.broadcast %78 : f32 to vector<8x128xf32>
    %80 = arith.addf %77, %79 : vector<8x128xf32>
    %cst_7 = arith.constant 0.000000e+00 : f32
    %81 = vector.broadcast %cst_7 : f32 to vector<8x128xf32>
    %82 = arith.maximumf %80, %81 : vector<8x128xf32>
    %c26 = arith.constant 26 : index
    %83 = memref.load %arg1[%c26] : memref<31xf32, #tpu.memory_space<smem>>
    %84 = vector.broadcast %83 : f32 to vector<8x128xf32>
    %85 = arith.mulf %84, %82 : vector<8x128xf32>
    %86 = arith.addf %74, %85 : vector<8x128xf32>
    %c7 = arith.constant 7 : index
    %87 = memref.load %arg1[%c7] : memref<31xf32, #tpu.memory_space<smem>>
    %88 = vector.broadcast %87 : f32 to vector<8x128xf32>
    %89 = arith.mulf %0, %88 : vector<8x128xf32>
    %c17 = arith.constant 17 : index
    %90 = memref.load %arg1[%c17] : memref<31xf32, #tpu.memory_space<smem>>
    %91 = vector.broadcast %90 : f32 to vector<8x128xf32>
    %92 = arith.addf %89, %91 : vector<8x128xf32>
    %cst_8 = arith.constant 0.000000e+00 : f32
    %93 = vector.broadcast %cst_8 : f32 to vector<8x128xf32>
    %94 = arith.maximumf %92, %93 : vector<8x128xf32>
    %c27 = arith.constant 27 : index
    %95 = memref.load %arg1[%c27] : memref<31xf32, #tpu.memory_space<smem>>
    %96 = vector.broadcast %95 : f32 to vector<8x128xf32>
    %97 = arith.mulf %96, %94 : vector<8x128xf32>
    %98 = arith.addf %86, %97 : vector<8x128xf32>
    %c8 = arith.constant 8 : index
    %99 = memref.load %arg1[%c8] : memref<31xf32, #tpu.memory_space<smem>>
    %100 = vector.broadcast %99 : f32 to vector<8x128xf32>
    %101 = arith.mulf %0, %100 : vector<8x128xf32>
    %c18 = arith.constant 18 : index
    %102 = memref.load %arg1[%c18] : memref<31xf32, #tpu.memory_space<smem>>
    %103 = vector.broadcast %102 : f32 to vector<8x128xf32>
    %104 = arith.addf %101, %103 : vector<8x128xf32>
    %cst_9 = arith.constant 0.000000e+00 : f32
    %105 = vector.broadcast %cst_9 : f32 to vector<8x128xf32>
    %106 = arith.maximumf %104, %105 : vector<8x128xf32>
    %c28 = arith.constant 28 : index
    %107 = memref.load %arg1[%c28] : memref<31xf32, #tpu.memory_space<smem>>
    %108 = vector.broadcast %107 : f32 to vector<8x128xf32>
    %109 = arith.mulf %108, %106 : vector<8x128xf32>
    %110 = arith.addf %98, %109 : vector<8x128xf32>
    %c9 = arith.constant 9 : index
    %111 = memref.load %arg1[%c9] : memref<31xf32, #tpu.memory_space<smem>>
    %112 = vector.broadcast %111 : f32 to vector<8x128xf32>
    %113 = arith.mulf %0, %112 : vector<8x128xf32>
    %c19 = arith.constant 19 : index
    %114 = memref.load %arg1[%c19] : memref<31xf32, #tpu.memory_space<smem>>
    %115 = vector.broadcast %114 : f32 to vector<8x128xf32>
    %116 = arith.addf %113, %115 : vector<8x128xf32>
    %cst_10 = arith.constant 0.000000e+00 : f32
    %117 = vector.broadcast %cst_10 : f32 to vector<8x128xf32>
    %118 = arith.maximumf %116, %117 : vector<8x128xf32>
    %c29 = arith.constant 29 : index
    %119 = memref.load %arg1[%c29] : memref<31xf32, #tpu.memory_space<smem>>
    %120 = vector.broadcast %119 : f32 to vector<8x128xf32>
    %121 = arith.mulf %120, %118 : vector<8x128xf32>
    %122 = arith.addf %110, %121 : vector<8x128xf32>
    %c0_11 = arith.constant 0 : index
    %c0_12 = arith.constant 0 : index
    %123 = vector.load %arg2[%c0_11, %c0_12] : memref<8x128xf32, #tpu.memory_space<vmem>>, vector<8x128xf32>
    tpu.vector_store %arg2[%c0_11, %c0_12], %122 {strides = array<i32>} : memref<8x128xf32, #tpu.memory_space<vmem>>, vector<8x128xf32>,
    return
  }
}

</mosaic_0001>

<llo_original>
// kernel: net_forward.1
$region0: #{net_forward.1}
  #allocation0 [shape = 'u32[]', space=smem, size = 0x4, offset = 0x4, fixed_abs, tag = 'smem constant byte address 0x4 - core index']
  #allocation1 [shape = 'u32[144,128]{1,0:T(1,128)}', space=vmem, size = 0x12000, scoped, tag = 'internal scratch']
  %s0 = inlined_call_operand.vmem [shape: f32[8,128], index: 0, kind: input, shape index: {}]
  %s1 = inlined_call_operand.vmem [shape: f32[31], index: 1, kind: input, shape index: {}]
  %s2 = inlined_call_operand.hbm [shape: f32[8,128], index: 2, kind: output, shape index: {}]
  %s3 = sld [smem:[#allocation0]]
  $region22: #{net_forward.1} parent=0
    _
  %s5 = ssub.s32 1, %s3
  %s6 = scalar_select 0, %s5, %s3
  $region1: #{net_forward.1} parent=0
    #allocation2 [shape = 'u8[512]{0}', space=smem, size = 0x200, scoped, tag = 'input window, operand 1, single buffered']
    #allocation3 [shape = 's32[1]{0}', space=sflag, size = 0x4, scoped, tag = 'scoped memory for net_forward.1']
    #allocation4 [shape = 's32[1]{0}', space=sflag, size = 0x4, scoped, tag = 'scoped memory for net_forward.1']
    #allocation5 [shape = 'u8[4096]{0}', space=vmem, size = 0x1000, scoped, tag = 'output window, operand 0, single buffered']
    %7 = vsyncpa [#allocation4], 0
    %8 = vsyncpa [#allocation3], 0
    // Predicated region
    $region2: #{net_forward.1} parent=1 // pred_check
      _
    $region3: #{net_forward.1} parent=1 // pred_check_branch
      %10 = sbr.rel (0) target = $region5
    $region4: #{net_forward.1} parent=1 // pred_region
      _
    $region5: #{net_forward.1} parent=1 // pred_fallthru
      _
    // Predicated region
    $region6: #{net_forward.1} parent=1 // pred_check
      _
    $region7: #{net_forward.1} parent=1 // pred_check_branch
      %12 = sbr.rel (0) target = $region9
    $region8: #{net_forward.1} parent=1 // pred_region
      %s14 = ssub.s32 16, 16
      %15 = vsyncadd [#allocation4], %s14
      %s17 = sshll.u32 %s1, 4
      %s18 = int_to_ptr.vmem [resolvable:$true] %s17
      %20 = dma.vmem_to_smem %s18, 16, [#allocation2], [#allocation4]
    $region9: #{net_forward.1} parent=1 // pred_fallthru
      _
    // Predicated region
    $region10: #{net_forward.1} parent=1 // pred_check
      _
    $region11: #{net_forward.1} parent=1 // pred_check_branch
      %22 = sbr.rel (0) target = $region13
    $region12: #{net_forward.1} parent=1 // pred_region
      %23 = dma.done [#allocation4], 16
    $region13: #{net_forward.1} parent=1 // pred_fallthru
      _
    %24 = sfence
    %v25 = vld [vmem:[%s0] sm:$0xff]
    %s26 = sld [smem:[#allocation2 + $0x1e]]
    %v27 = vstv %s26
    %s28 = sld [smem:[#allocation2]]
    %v29 = vstv %s28
    %v30 = vmul.f32 %v25, %v29
    %s31 = sld [smem:[#allocation2 + $0xa]]
    %v32 = vstv %s31
    %v33 = vadd.f32 %v30, %v32
    %v34 = vmax.f32 %v33, 0.0
    %s35 = sld [smem:[#allocation2 + $0x14]]
    %v36 = vstv %s35
    %v37 = vmul.f32 %v36, %v34
    %v38 = vadd.f32 %v27, %v37
    %s39 = sld [smem:[#allocation2 + $0x1]]
    %v40 = vstv %s39
    %v41 = vmul.f32 %v25, %v40
    %s42 = sld [smem:[#allocation2 + $0xb]]
    %v43 = vstv %s42
    %v44 = vadd.f32 %v41, %v43
    %v45 = vmax.f32 %v44, 0.0
    %s46 = sld [smem:[#allocation2 + $0x15]]
    %v47 = vstv %s46
    %v48 = vmul.f32 %v47, %v45
    %v49 = vadd.f32 %v38, %v48
    %s50 = sld [smem:[#allocation2 + $0x2]]
    %v51 = vstv %s50
    %v52 = vmul.f32 %v25, %v51
    %s53 = sld [smem:[#allocation2 + $0xc]]
    %v54 = vstv %s53
    %v55 = vadd.f32 %v52, %v54
    %v56 = vmax.f32 %v55, 0.0
    %s57 = sld [smem:[#allocation2 + $0x16]]
    %v58 = vstv %s57
    %v59 = vmul.f32 %v58, %v56
    %v60 = vadd.f32 %v49, %v59
    %s61 = sld [smem:[#allocation2 + $0x3]]
    %v62 = vstv %s61
    %v63 = vmul.f32 %v25, %v62
    %s64 = sld [smem:[#allocation2 + $0xd]]
    %v65 = vstv %s64
    %v66 = vadd.f32 %v63, %v65
    %v67 = vmax.f32 %v66, 0.0
    %s68 = sld [smem:[#allocation2 + $0x17]]
    %v69 = vstv %s68
    %v70 = vmul.f32 %v69, %v67
    %v71 = vadd.f32 %v60, %v70
    %s72 = sld [smem:[#allocation2 + $0x4]]
    %v73 = vstv %s72
    %v74 = vmul.f32 %v25, %v73
    %s75 = sld [smem:[#allocation2 + $0xe]]
    %v76 = vstv %s75
    %v77 = vadd.f32 %v74, %v76
    %v78 = vmax.f32 %v77, 0.0
    %s79 = sld [smem:[#allocation2 + $0x18]]
    %v80 = vstv %s79
    %v81 = vmul.f32 %v80, %v78
    %v82 = vadd.f32 %v71, %v81
    %s83 = sld [smem:[#allocation2 + $0x5]]
    %v84 = vstv %s83
    %v85 = vmul.f32 %v25, %v84
    %s86 = sld [smem:[#allocation2 + $0xf]]
    %v87 = vstv %s86
    %v88 = vadd.f32 %v85, %v87
    %v89 = vmax.f32 %v88, 0.0
    %s90 = sld [smem:[#allocation2 + $0x19]]
    %v91 = vstv %s90
    %v92 = vmul.f32 %v91, %v89
    %v93 = vadd.f32 %v82, %v92
    %s94 = sld [smem:[#allocation2 + $0x6]]
    %v95 = vstv %s94
    %v96 = vmul.f32 %v25, %v95
    %s97 = sld [smem:[#allocation2 + $0x10]]
    %v98 = vstv %s97
    %v99 = vadd.f32 %v96, %v98
    %v100 = vmax.f32 %v99, 0.0
    %s101 = sld [smem:[#allocation2 + $0x1a]]
    %v102 = vstv %s101
    %v103 = vmul.f32 %v102, %v100
    %v104 = vadd.f32 %v93, %v103
    %s105 = sld [smem:[#allocation2 + $0x7]]
    %v106 = vstv %s105
    %v107 = vmul.f32 %v25, %v106
    %s108 = sld [smem:[#allocation2 + $0x11]]
    %v109 = vstv %s108
    %v110 = vadd.f32 %v107, %v109
    %v111 = vmax.f32 %v110, 0.0
    %s112 = sld [smem:[#allocation2 + $0x1b]]
    %v113 = vstv %s112
    %v114 = vmul.f32 %v113, %v111
    %v115 = vadd.f32 %v104, %v114
    %s116 = sld [smem:[#allocation2 + $0x8]]
    %v117 = vstv %s116
    %v118 = vmul.f32 %v25, %v117
    %s119 = sld [smem:[#allocation2 + $0x12]]
    %v120 = vstv %s119
    %v121 = vadd.f32 %v118, %v120
    %v122 = vmax.f32 %v121, 0.0
    %s123 = sld [smem:[#allocation2 + $0x1c]]
    %v124 = vstv %s123
    %v125 = vmul.f32 %v124, %v122
    %v126 = vadd.f32 %v115, %v125
    %s127 = sld [smem:[#allocation2 + $0x9]]
    %v128 = vstv %s127
    %v129 = vmul.f32 %v25, %v128
    %s130 = sld [smem:[#allocation2 + $0x13]]
    %v131 = vstv %s130
    %v132 = vadd.f32 %v129, %v131
    %v133 = vmax.f32 %v132, 0.0
    %s134 = sld [smem:[#allocation2 + $0x1d]]
    %v135 = vstv %s134
    %v136 = vmul.f32 %v135, %v133
    %v137 = vadd.f32 %v126, %v136
    %138 = vst [vmem:[#allocation5] sm:$0xff] %v137
    // Predicated region
    $region14: #{net_forward.1} parent=1 // pred_check
      _
    $region15: #{net_forward.1} parent=1 // pred_check_branch
      %140 = sbr.rel (0) target = $region17
    $region16: #{net_forward.1} parent=1 // pred_region
      %s142 = ssub.s32 128, 128
      %143 = vsyncadd [#allocation3], %s142
      %s145 = sshll.u32 [#allocation5], 4
      %s146 = int_to_ptr.vmem [resolvable:$true] %s145
      %148 = dma.vmem_to_hbm [thread:$0]  %s146, 128, %s2, [#allocation3]
    $region17: #{net_forward.1} parent=1 // pred_fallthru
      _
    // Predicated region
    $region18: #{net_forward.1} parent=1 // pred_check
      _
    $region19: #{net_forward.1} parent=1 // pred_check_branch
      %150 = sbr.rel (0) target = $region21
    $region20: #{net_forward.1} parent=1 // pred_region
      %151 = dma.done [#allocation3], 128
    $region21: #{net_forward.1} parent=1 // pred_fallthru
      _
    %152 = vsyncpa [#allocation3], 1
    %153 = vsyncpa [#allocation4], 1

</llo_original>
